<compile_context>
chip_gen: v5e
topology: v5e:2x2
jax: 0.10.0
libtpu: 0.0.40
codegen_flags: <defaults>
</compile_context>

<pallas_src>
import jax
import jax.numpy as jnp
from jax.experimental import pallas as pl
from jax.experimental.pallas import tpu as pltpu


def base_decoder_kernel(x_ref, o_ref):
    # Identity semantics (base class defines no transformation). Concrete
    # decoders replace this body with their per-tile compute.
    o_ref[...] = x_ref[...]


def _sublane_multiple(dtype):
    # Minimal legal second-to-last block dim per dtype packing.
    itemsize = jnp.dtype(dtype).itemsize
    return {4: 8, 2: 16, 1: 32}.get(itemsize, 8)


def _pick_lane_width(total, sub):
    candidates = (512, 1024, 2048, 4096, 256, 128)
    # Pass 1: prefer widths whose row count fills whole (sub, 128) vreg tiles.
    for lanes in candidates:
        rows = total // lanes
        if total % lanes == 0 and rows >= sub and rows % sub == 0:
            return lanes
    # Pass 2: any lane-dense divisor.
    for lanes in candidates:
        if total % lanes == 0:
            return lanes
    return None


def _default_tile_bytes():
    # Generation-aware per-block budget (4x double-buffered in+out footprint
    # stays well inside scoped VMEM once vmem_limit_bytes is raised).
    try:
        kind = jax.devices()[0].device_kind.lower()
        if "v7" in kind:
            return 8 * 1024 * 1024   # amortize ~0.35us/step vs 3.2 TB/s HBM
        if "v5" in kind:
            return 3 * 1024 * 1024   # smaller scoped VMEM, slower HBM
    except Exception:
        pass
    return 4 * 1024 * 1024           # v6e & safe default


def _pick_tile_rows(rows, sub, row_bytes, max_tile_bytes):
    if rows <= sub:
        return rows  # full-extent block is always legal
    cap = max(sub, (max_tile_bytes // max(row_bytes, 1)) // sub * sub)
    # Keep >=2 grid steps when there is enough work (v7x: feed both TCs).
    if rows >= 2 * sub:
        cap = min(cap, max(sub, (rows // 2) // sub * sub))
    cap = min(cap, max(sub, rows // sub * sub))
    # Prefer an even divisor of rows -> no ragged masked tail block.
    for cand in range(cap, sub - 1, -sub):
        if rows % cand == 0:
            return cand
    return cap


def base_decoder_pallas_template(x, *, max_tile_bytes=None):
    """Pallas identity-copy template (the tiling skeleton subclasses fill in)."""
    if max_tile_bytes is None:
        max_tile_bytes = _default_tile_bytes()

    orig_shape = x.shape
    total = x.size
    itemsize = jnp.dtype(x.dtype).itemsize
    sub = _sublane_multiple(x.dtype)

    # Lane-dense view: pad the flat size to a multiple of 128 so stores are
    # whole-vreg `vst`, never 7-lane masked partial stores.
    pad = (-total) % 128
    flat = x.reshape(-1)
    if pad:
        flat = jnp.pad(flat, (0, pad))
    total_p = total + pad

    lanes = _pick_lane_width(total_p, sub)
    rows = total_p // lanes
    x2d = flat.reshape(rows, lanes)

    row_bytes = lanes * itemsize
    tile_rows = _pick_tile_rows(rows, sub, row_bytes, max_tile_bytes)
    grid = (pl.cdiv(rows, tile_rows),)

    out2d = pl.pallas_call(
        base_decoder_kernel,
        out_shape=jax.ShapeDtypeStruct((rows, lanes), x.dtype),
        grid_spec=pltpu.PrefetchScalarGridSpec(
            num_scalar_prefetch=0,
            grid=grid,
            in_specs=[pl.BlockSpec((tile_rows, lanes), lambda i: (i, 0))],
            out_specs=pl.BlockSpec((tile_rows, lanes), lambda i: (i, 0)),
        ),
        cost_estimate=pl.CostEstimate(
            flops=0,
            transcendentals=0,
            bytes_accessed=2 * total_p * itemsize,
        ),
        compiler_params=pltpu.CompilerParams(
            dimension_semantics=("parallel",),
            vmem_limit_bytes=48 * 1024 * 1024,
        ),
    )(x2d)

    out_flat = out2d.reshape(-1)
    if pad:
        out_flat = out_flat[:total]
    return out_flat.reshape(orig_shape)


def base_decoder_forward(x):
    """Faithful BaseDecoder forward: the base class defines no computation.

    Per review, short-circuit instead of streaming the tensor through a
    do-nothing kernel (2x tensor size of HBM traffic for zero compute).
    """
    return x


if __name__ == "__main__":
    # Faithful forward: identity short-circuit.
    shape = (2, 4, 16, 16)
    x = jax.random.normal(jax.random.PRNGKey(0), shape, dtype=jnp.float32)
    y0 = jax.block_until_ready(base_decoder_forward(x))
    assert y0.shape == shape and jnp.array_equal(y0, x)

    # Pallas template path: lane-dense single-block copy (rows=8, lanes=256).
    y1 = jax.block_until_ready(base_decoder_pallas_template(x))
    assert y1.shape == shape and jnp.array_equal(y1, x)

    # Multi-step pipelined path: >=2 grid steps (exercises double buffering and
    # the "parallel" axis that v7x shards across its two TensorCores).
    shape2 = (2, 4, 32, 32)
    x2 = jax.random.normal(jax.random.PRNGKey(1), shape2, dtype=jnp.float32)
    y2 = jax.block_until_ready(
        base_decoder_pallas_template(x2, max_tile_bytes=4096))
    assert jnp.array_equal(y2, x2)

    # Non-multiple-of-128 path: padded to a lane-dense view, sliced back.
    shape3 = (2, 3, 5, 7)
    x3 = jax.random.normal(jax.random.PRNGKey(2), shape3, dtype=jnp.float32)
    y3 = jax.block_until_ready(base_decoder_pallas_template(x3))
    assert jnp.array_equal(y3, x3)

    print("KERNEL_OK")
</pallas_src>

<mosaic_0001>
module attributes {stable_mosaic.version = 11 : i64} {
  func.func @base_decoder_kernel(%arg0: i32, %arg1: memref<8x256xf32, #tpu.memory_space<vmem>>, %arg2: memref<8x256xf32, #tpu.memory_space<vmem>>) attributes {dimension_semantics = [#tpu.dimension_semantics<parallel>], iteration_bounds = array<i64: 1>, scalar_prefetch = 0 : i64, scratch_operands = 0 : i64, tpu.core_type = #tpu.core_type<tc>, window_params = [{transform_indices = @transform_0, window_bounds = array<i64: 8, 256>}, {transform_indices = @transform_1, window_bounds = array<i64: 8, 256>}]} {
    %c0 = arith.constant 0 : index
    %c0_0 = arith.constant 0 : index
    %0 = vector.load %arg1[%c0, %c0_0] : memref<8x256xf32, #tpu.memory_space<vmem>>, vector<8x256xf32>
    %c0_1 = arith.constant 0 : index
    %c0_2 = arith.constant 0 : index
    %1 = vector.load %arg2[%c0_1, %c0_2] : memref<8x256xf32, #tpu.memory_space<vmem>>, vector<8x256xf32>
    tpu.vector_store %arg2[%c0_1, %c0_2], %0 {strides = array<i32>} : memref<8x256xf32, #tpu.memory_space<vmem>>, vector<8x256xf32>,
    return
  }
  func.func @transform_0(%arg0: i32) -> (i32, i32) {
    %c0_i32 = arith.constant 0 : i32
    %c0_i32_0 = arith.constant 0 : i32
    return %arg0, %c0_i32 : i32, i32
  }
  func.func @transform_1(%arg0: i32) -> (i32, i32) {
    %c0_i32 = arith.constant 0 : i32
    %c0_i32_0 = arith.constant 0 : i32
    return %arg0, %c0_i32 : i32, i32
  }
}

</mosaic_0001>

<llo_original>
// kernel: tpu_custom_call.1
$region0: #{tpu_custom_call.1}
  #allocation0 [shape = 'u32[]', space=smem, size = 0x4, offset = 0x4, fixed_abs, tag = 'smem constant byte address 0x4 - core index']
  #allocation1 [shape = 'u32[72,128]{1,0:T(1,128)}', space=vmem, size = 0x9000, scoped, tag = 'internal scratch']
  %s0 = inlined_call_operand.hbm [shape: f32[8,256], index: 0, kind: input, shape index: {}]
  %s1 = inlined_call_operand.hbm [shape: f32[8,256], index: 1, kind: output, shape index: {}]
  %s2 = sld [smem:[#allocation0]]
  $region18: #{tpu_custom_call.1} parent=0
    _
  %s4 = ssub.s32 1, %s2
  %s5 = scalar_select 0, %s4, %s2
  $region1: #{tpu_custom_call.1} parent=0
    #allocation2 [shape = 'u8[8192]{0}', space=vmem, size = 0x2000, scoped, tag = 'input window, operand 0, single buffered']
    #allocation3 [shape = 's32[1]{0}', space=sflag, size = 0x4, scoped, tag = 'scoped memory for tpu_custom_call.1']
    #allocation4 [shape = 's32[1]{0}', space=sflag, size = 0x4, scoped, tag = 'scoped memory for tpu_custom_call.1']
    #allocation5 [shape = 'u8[8192]{0}', space=vmem, size = 0x2000, scoped, tag = 'output window, operand 0, single buffered']
    %6 = vsyncpa [#allocation3], 0
    %7 = vsyncpa [#allocation4], 0
    // Predicated region
    $region2: #{tpu_custom_call.1} parent=1 // pred_check
      _
    $region3: #{tpu_custom_call.1} parent=1 // pred_check_branch
      %9 = sbr.rel (0) target = $region5
    $region4: #{tpu_custom_call.1} parent=1 // pred_region
      %11 = vsyncadd [#allocation3], 0
      %s13 = sshll.u32 %s0, 4
      %s14 = int_to_ptr.hbm [resolvable:$true] %s13
      %s15 = sshll.u32 [#allocation2], 4
      %s16 = int_to_ptr.vmem [resolvable:$true] %s15
      %18 = dma.hbm_to_vmem [thread:$0]  %s14, 256, %s16, [#allocation3]
    $region5: #{tpu_custom_call.1} parent=1 // pred_fallthru
      _
    // Predicated region
    $region6: #{tpu_custom_call.1} parent=1 // pred_check
      _
    $region7: #{tpu_custom_call.1} parent=1 // pred_check_branch
      %20 = sbr.rel (0) target = $region9
    $region8: #{tpu_custom_call.1} parent=1 // pred_region
      %22 = dma.done [#allocation3], 256
    $region9: #{tpu_custom_call.1} parent=1 // pred_fallthru
      _
    %v23 = vld [vmem:[#allocation2] sm:$0xff]
    %v24 = vld [vmem:[#allocation2 + $0x8] sm:$0xff]
    %25 = vst [vmem:[#allocation5] sm:$0xff] %v23
    %26 = vst [vmem:[#allocation5 + $0x8] sm:$0xff] %v24
    // Predicated region
    $region10: #{tpu_custom_call.1} parent=1 // pred_check
      _
    $region11: #{tpu_custom_call.1} parent=1 // pred_check_branch
      %28 = sbr.rel (0) target = $region13
    $region12: #{tpu_custom_call.1} parent=1 // pred_region
      %30 = vsyncadd [#allocation4], 0
      %s32 = sshll.u32 [#allocation5], 4
      %s33 = int_to_ptr.vmem [resolvable:$true] %s32
      %s34 = sshll.u32 %s1, 4
      %s35 = int_to_ptr.hbm [resolvable:$true] %s34
      %37 = dma.vmem_to_hbm [thread:$0]  %s33, 256, %s35, [#allocation4]
    $region13: #{tpu_custom_call.1} parent=1 // pred_fallthru
      _
    // Predicated region
    $region14: #{tpu_custom_call.1} parent=1 // pred_check
      _
    $region15: #{tpu_custom_call.1} parent=1 // pred_check_branch
      %39 = sbr.rel (0) target = $region17
    $region16: #{tpu_custom_call.1} parent=1 // pred_region
      %41 = dma.done [#allocation4], 256
    $region17: #{tpu_custom_call.1} parent=1 // pred_fallthru
      _
    %42 = vsyncpa [#allocation3], 1
    %43 = vsyncpa [#allocation4], 1

</llo_original>
